<compile_context>
chip_gen: v7x
topology: tpu7x:2x2x1
jax: 0.10.0
libtpu: 0.0.40
codegen_flags: <defaults>
</compile_context>

<pallas_src>
import jax
import jax.numpy as jnp
from jax.experimental import pallas as pl
from jax.experimental.pallas import tpu as pltpu


# ----------------------------------------------------------------------------
# Secondary path: explicit lane-dense streaming-copy kernel.
# ----------------------------------------------------------------------------
def _copy_kernel(x_ref, o_ref):
    # Pure copy: load the tile and store it back unchanged.
    o_ref[...] = x_ref[...]


_LANE = 128                   # full vreg lane width -> unmasked vst
_ROW_ALIGN = 32               # keeps bf16/int8 packed sublanes full-width
_SMALL_BYTES = 512 << 10      # below this: single whole-array block, grid of 1
_MAX_BLOCK_BYTES = 8 << 20    # ~8 MiB blocks (~2.6 us/step v7x, ~6 us v6e)
_MIN_BLOCK_BYTES = 512 << 10  # keep per-step DMA large vs ~0.35 us step cost


def _pick_tile_rows(rows: int, itemsize: int) -> int:
    """Choose the block's row count (lane width is fixed at 128)."""
    row_bytes = _LANE * itemsize
    max_rows = max(_ROW_ALIGN,
                   (_MAX_BLOCK_BYTES // row_bytes) // _ROW_ALIGN * _ROW_ALIGN)
    min_rows = max(_ROW_ALIGN,
                   (_MIN_BLOCK_BYTES // row_bytes) // _ROW_ALIGN * _ROW_ALIGN)
    # Aim for >= ~4 grid steps so ("parallel",) can split blocks over both
    # v7x TensorCores; never go below the min block (step-overhead floor).
    target = pl.cdiv(pl.cdiv(rows, 4), _ROW_ALIGN) * _ROW_ALIGN
    return min(max_rows, max(min_rows, target))


def identity_copy(x: jax.Array) -> jax.Array:
    """Identity as an explicit HBM->VMEM->HBM streaming-copy kernel."""
    if x.size == 0:
        return x

    orig_shape = x.shape
    total = x.size
    itemsize = x.dtype.itemsize
    nbytes = total * itemsize

    flat = x.reshape(total)
    # Pad only up to a 128-lane multiple (no-op when total % 128 == 0), so
    # every store is a full-width unmasked vst without extra full passes.
    padded = pl.cdiv(total, _LANE) * _LANE
    if padded != total:
        flat = jnp.pad(flat, (0, padded - total))
    rows = padded // _LANE
    x2 = flat.reshape(rows, _LANE)

    if nbytes <= _SMALL_BYTES:
        # Single whole-array block (block_shape == full array dims, so the
        # (8, 128) divisibility rule does not apply).  No grid overhead.
        tile_rows = rows
        grid_len = 1
    else:
        tile_rows = _pick_tile_rows(rows, itemsize)
        # Ragged final block is masked by Pallas (OOB writes are discarded).
        grid_len = pl.cdiv(rows, tile_rows)

    out2 = pl.pallas_call(
        _copy_kernel,
        out_shape=jax.ShapeDtypeStruct((rows, _LANE), x2.dtype),
        grid_spec=pltpu.PrefetchScalarGridSpec(
            num_scalar_prefetch=0,
            grid=(grid_len,),
            in_specs=[pl.BlockSpec((tile_rows, _LANE), lambda i: (i, 0))],
            out_specs=pl.BlockSpec((tile_rows, _LANE), lambda i: (i, 0)),
        ),
        compiler_params=pltpu.CompilerParams(
            dimension_semantics=("parallel",),
            # Double-buffered in+out at 8 MiB blocks is 32 MiB: above v5e's
            # 16 MiB / at v6e's 32 MiB scoped default, so set the limit
            # explicitly (48 MiB still fits v7x's 64 MiB physical VMEM).
            vmem_limit_bytes=48 << 20,
        ),
        cost_estimate=pl.CostEstimate(
            flops=0, transcendentals=0,
            bytes_accessed=2 * rows * _LANE * itemsize,
        ),
    )(x2)

    out_flat = out2.reshape(padded)
    if padded != total:
        out_flat = out_flat[:total]
    return out_flat.reshape(orig_shape)


# ----------------------------------------------------------------------------
# Primary path: aliased no-op kernel (zero kernel-side HBM traffic).
# ----------------------------------------------------------------------------
def _identity_alias_kernel(x_ref, o_ref):
    # x_ref and o_ref alias the same HBM buffer (input_output_aliases={0: 0}),
    # so the output already holds the input values: nothing to do.
    del x_ref, o_ref


def _identity_aliased(x: jax.Array) -> jax.Array:
    return pl.pallas_call(
        _identity_alias_kernel,
        out_shape=jax.ShapeDtypeStruct(x.shape, x.dtype),
        in_specs=[pl.BlockSpec(memory_space=pl.ANY)],
        out_specs=pl.BlockSpec(memory_space=pl.ANY),
        input_output_aliases={0: 0},
    )(x)


def identity(x: jax.Array) -> jax.Array:
    """Identity.forward(x): return x unchanged (same shape/dtype/values)."""
    if x.size == 0 or x.ndim == 0:
        # Degenerate cases: the true identity is x itself (zero cost).
        return x
    try:
        return _identity_aliased(x)
    except Exception:
        # Robust fallback if operand/output aliasing is rejected on this
        # backend: fall back to the explicit streaming-copy kernel.
        return identity_copy(x)


if __name__ == "__main__":
    key = jax.random.PRNGKey(0)

    # Small NCHW input consistent with a VGG-style feature map.
    x = jax.random.normal(key, (2, 4, 16, 16), dtype=jnp.float32)

    # Primary (aliased no-op) path.
    y = jax.block_until_ready(identity(x))
    assert y.shape == x.shape, f"shape mismatch: {y.shape} vs {x.shape}"
    assert y.dtype == x.dtype, f"dtype mismatch: {y.dtype} vs {x.dtype}"
    assert bool(jnp.all(y == x)), "identity output differs from input"

    # Copy-kernel path: lane-aligned small case (single block).
    y2 = jax.block_until_ready(identity_copy(x))
    assert y2.shape == x.shape and y2.dtype == x.dtype
    assert bool(jnp.all(y2 == x)), "identity_copy output differs from input"

    # Copy-kernel path: size not a multiple of 128 (exercises pad/slice).
    x_odd = jax.random.normal(jax.random.PRNGKey(1), (3, 5, 7), dtype=jnp.float32)
    y3 = jax.block_until_ready(identity_copy(x_odd))
    assert y3.shape == x_odd.shape and y3.dtype == x_odd.dtype
    assert bool(jnp.all(y3 == x_odd)), "padded identity_copy differs from input"

    # Copy-kernel path: just above the small threshold (exercises the tiled
    # grid with a ragged final block, no block-multiple padding).
    x_big = jax.random.normal(jax.random.PRNGKey(2), (64, 2050), dtype=jnp.float32)
    y4 = jax.block_until_ready(identity_copy(x_big))
    assert y4.shape == x_big.shape and y4.dtype == x_big.dtype
    assert bool(jnp.all(y4 == x_big)), "tiled identity_copy differs from input"

    print("KERNEL_OK")
</pallas_src>

<mosaic_0001>
module attributes {stable_mosaic.version = 11 : i64} {
  func.func @_identity_alias_kernel(%arg0: memref<2x4x16x16xf32, #tpu.memory_space<any>>, %arg1: memref<2x4x16x16xf32, #tpu.memory_space<any>>) attributes {dimension_semantics = [], scalar_prefetch = 0 : i64, scratch_operands = 0 : i64, tpu.core_type = #tpu.core_type<tc>} {
    return
  }
}

module attributes {stable_mosaic.version = 11 : i64} {
  func.func @_copy_kernel(%arg0: i32, %arg1: memref<16x128xf32, #tpu.memory_space<vmem>>, %arg2: memref<16x128xf32, #tpu.memory_space<vmem>>) attributes {dimension_semantics = [#tpu.dimension_semantics<parallel>], iteration_bounds = array<i64: 1>, scalar_prefetch = 0 : i64, scratch_operands = 0 : i64, tpu.core_type = #tpu.core_type<tc>, window_params = [{transform_indices = @transform_0, window_bounds = array<i64: 16, 128>}, {transform_indices = @transform_1, window_bounds = array<i64: 16, 128>}]} {
    %c0 = arith.constant 0 : index
    %c0_0 = arith.constant 0 : index
    %0 = vector.load %arg1[%c0, %c0_0] : memref<16x128xf32, #tpu.memory_space<vmem>>, vector<16x128xf32>
    %c0_1 = arith.constant 0 : index
    %c0_2 = arith.constant 0 : index
    %1 = vector.load %arg2[%c0_1, %c0_2] : memref<16x128xf32, #tpu.memory_space<vmem>>, vector<16x128xf32>
    tpu.vector_store %arg2[%c0_1, %c0_2], %0 {strides = array<i32>} : memref<16x128xf32, #tpu.memory_space<vmem>>, vector<16x128xf32>,
    return
  }
  func.func @transform_0(%arg0: i32) -> (i32, i32) {
    %c0_i32 = arith.constant 0 : i32
    %c0_i32_0 = arith.constant 0 : i32
    return %arg0, %c0_i32 : i32, i32
  }
  func.func @transform_1(%arg0: i32) -> (i32, i32) {
    %c0_i32 = arith.constant 0 : i32
    %c0_i32_0 = arith.constant 0 : i32
    return %arg0, %c0_i32 : i32, i32
  }
}

</mosaic_0001>

<llo_original>
// kernel: tpu_custom_call.1
$region0: #{tpu_custom_call.1}
  #allocation0 [shape = 'u32[]', space=smem, size = 0x4, offset = 0x4, fixed_abs, tag = 'smem constant byte address 0x4 - core index']
  #allocation1 [shape = 'u32[144,128]{1,0:T(1,128)}', space=vmem, size = 0x12000, scoped, tag = 'internal scratch']
  %s0 = inlined_call_operand.hbm [shape: f32[2,4,16,16], index: 0, kind: input, shape index: {}, may-alias: {0,1}]
  %s1 = inlined_call_operand.hbm [shape: f32[2,4,16,16], index: 1, kind: output, shape index: {}, may-alias: {0,1}]
  %s2 = sld [smem:[#allocation0]]
  $region2: #{tpu_custom_call.1} parent=0
    _
  %s4 = ssub.s32 1, %s2
  %s5 = scalar_select 0, %s4, %s2

// kernel: tpu_custom_call.1
$region0: #{tpu_custom_call.1}
  #allocation0 [shape = 'u32[]', space=smem, size = 0x4, offset = 0x4, fixed_abs, tag = 'smem constant byte address 0x4 - core index']
  #allocation1 [shape = 'u32[144,128]{1,0:T(1,128)}', space=vmem, size = 0x12000, scoped, tag = 'internal scratch']
  %s0 = inlined_call_operand.hbm [shape: f32[16,128], index: 0, kind: input, shape index: {}]
  %s1 = inlined_call_operand.hbm [shape: f32[16,128], index: 1, kind: output, shape index: {}]
  %s2 = sld [smem:[#allocation0]]
  $region18: #{tpu_custom_call.1} parent=0
    _
  %s4 = ssub.s32 1, %s2
  %s5 = scalar_select 0, %s4, %s2
  $region1: #{tpu_custom_call.1} parent=0
    #allocation2 [shape = 'u8[8192]{0}', space=vmem, size = 0x2000, scoped, tag = 'input window, operand 0, single buffered']
    #allocation3 [shape = 's32[1]{0}', space=sflag, size = 0x4, scoped, tag = 'scoped memory for tpu_custom_call.1']
    #allocation4 [shape = 's32[1]{0}', space=sflag, size = 0x4, scoped, tag = 'scoped memory for tpu_custom_call.1']
    #allocation5 [shape = 'u8[8192]{0}', space=vmem, size = 0x2000, scoped, tag = 'output window, operand 0, single buffered']
    %6 = vsyncpa [#allocation3], 0
    %7 = vsyncpa [#allocation4], 0
    // Predicated region
    $region2: #{tpu_custom_call.1} parent=1 // pred_check
      _
    $region3: #{tpu_custom_call.1} parent=1 // pred_check_branch
      %9 = sbr.rel (0) target = $region5
    $region4: #{tpu_custom_call.1} parent=1 // pred_region
      %s11 = ssub.s32 256, 256
      %12 = vsyncadd [#allocation3], %s11
      %s13 = sshll.u32 [#allocation2], 4
      %s14 = int_to_ptr.vmem [resolvable:$true] %s13
      %19 = dma.hbm_to_vmem [thread:$0]  %s0, 256, %s14, [#allocation3], 128, 128, 8
    $region5: #{tpu_custom_call.1} parent=1 // pred_fallthru
      _
    // Predicated region
    $region6: #{tpu_custom_call.1} parent=1 // pred_check
      _
    $region7: #{tpu_custom_call.1} parent=1 // pred_check_branch
      %21 = sbr.rel (0) target = $region9
    $region8: #{tpu_custom_call.1} parent=1 // pred_region
      %22 = dma.done [#allocation3], 256
    $region9: #{tpu_custom_call.1} parent=1 // pred_fallthru
      _
    %v23 = vld [vmem:[#allocation2] sm:$0xff]
    %v24 = vld [vmem:[#allocation2 + $0x8] sm:$0xff]
    %25 = vst [vmem:[#allocation5] sm:$0xff] %v23
    %26 = vst [vmem:[#allocation5 + $0x8] sm:$0xff] %v24
    // Predicated region
    $region10: #{tpu_custom_call.1} parent=1 // pred_check
      _
    $region11: #{tpu_custom_call.1} parent=1 // pred_check_branch
      %28 = sbr.rel (0) target = $region13
    $region12: #{tpu_custom_call.1} parent=1 // pred_region
      %s30 = ssub.s32 256, 256
      %31 = vsyncadd [#allocation4], %s30
      %s32 = sshll.u32 [#allocation5], 4
      %s33 = int_to_ptr.vmem [resolvable:$true] %s32
      %38 = dma.vmem_to_hbm [thread:$0]  %s33, 256, %s1, [#allocation4], 128, 128, 8
    $region13: #{tpu_custom_call.1} parent=1 // pred_fallthru
      _
    // Predicated region
    $region14: #{tpu_custom_call.1} parent=1 // pred_check
      _
    $region15: #{tpu_custom_call.1} parent=1 // pred_check_branch
      %40 = sbr.rel (0) target = $region17
    $region16: #{tpu_custom_call.1} parent=1 // pred_region
      %41 = dma.done [#allocation4], 256
    $region17: #{tpu_custom_call.1} parent=1 // pred_fallthru
      _
    %42 = vsyncpa [#allocation3], 1
    %43 = vsyncpa [#allocation4], 1

</llo_original>
